<compile_context>
chip_gen: v7x
topology: tpu7x:2x2x1
jax: 0.10.0
libtpu: 0.0.40
codegen_flags: <defaults>
</compile_context>

<pallas_src>
import functools

import jax
import jax.numpy as jnp
from jax.experimental import pallas as pl
from jax.experimental.pallas import tpu as pltpu

LANES = 128
_MIB = 1024 * 1024


def _swish_kernel(x_ref, o_ref):
    x = x_ref[...].astype(jnp.float32)
    # x * sigmoid(x); the exp goes through the EUP path (hidden by the DMA).
    o_ref[...] = (x * jax.nn.sigmoid(x)).astype(o_ref.dtype)


def _swish_plain(x: jax.Array) -> jax.Array:
    xf = x.astype(jnp.float32)
    return (xf * jax.nn.sigmoid(xf)).astype(x.dtype)


def _round_up(a: int, b: int) -> int:
    return (a + b - 1) // b * b


@functools.lru_cache(maxsize=1)
def _chip_defaults():
    """Return (block_bytes, vmem_limit_bytes) tuned for the local TPU gen."""
    vmem = 0
    try:
        vmem = int(getattr(pltpu.get_tpu_info(), "vmem_capacity_bytes", 0) or 0)
    except Exception:
        vmem = 0
    kind = ""
    try:
        kind = jax.devices()[0].device_kind.lower()
    except Exception:
        kind = ""

    is_v7 = ("v7" in kind) or (0 < vmem <= 64 * _MIB)
    if is_v7:
        # v7x: 64 MiB per-TC VMEM but ~3.2 TB/s HBM -> bigger blocks amortize
        # the ~0.35us/step overhead; 4 x 6 MiB double-buffered = 24 MiB << 48.
        return 6 * _MIB, 48 * _MIB
    if vmem > 64 * _MIB or "v5" in kind or "v6" in kind:
        # v5e / v6e: 128 MiB physical VMEM, slower HBM; 4 MiB blocks suffice.
        return 4 * _MIB, 64 * _MIB
    # Unknown chip: sizes that are safe everywhere.
    return 4 * _MIB, 48 * _MIB


def _pick_width(n: int) -> int:
    """Widest lane slab (multiple of 128) that divides n with >= 8 rows."""
    for w in (2048, 1024, 512, 256, 128):
        if n % w == 0 and n // w >= 8:
            return w
    return LANES  # caller guarantees n % 128 == 0


def _swish_2d(x2d: jax.Array, *, block_bytes: int, vmem_limit_bytes: int,
              donate: bool) -> jax.Array:
    rows, width = x2d.shape
    elem_bytes = jnp.dtype(x2d.dtype).itemsize
    # Native sublane granularity for this dtype (8: 32-bit, 16: 16-bit, 32: 8-bit).
    gran = max(8, 32 // elem_bytes)

    # Largest row tile that fits the target block size ...
    big_tr = max(gran, (block_bytes // (width * elem_bytes)) // gran * gran)
    # ... but never fewer than ~4 grid steps: keeps Pallas double-buffering the
    # DMAs and lets the "parallel" axis shard across v7x's 2 TensorCores.
    quarter = _round_up(max(1, (rows + 3) // 4), gran)
    tr = min(big_tr, quarter)

    if tr >= rows:
        tr = rows            # full-array block (tiny slab) is always legal
        grid = (1,)
    else:
        grid = (pl.cdiv(rows, tr),)   # ragged last block handled by Pallas

    kwargs = {}
    if donate:
        kwargs["input_output_aliases"] = {0: 0}

    return pl.pallas_call(
        _swish_kernel,
        out_shape=jax.ShapeDtypeStruct((rows, width), x2d.dtype),
        grid_spec=pltpu.PrefetchScalarGridSpec(
            num_scalar_prefetch=0,
            grid=grid,
            in_specs=[pl.BlockSpec((tr, width), lambda i: (i, 0))],
            out_specs=pl.BlockSpec((tr, width), lambda i: (i, 0)),
        ),
        compiler_params=pltpu.CompilerParams(
            dimension_semantics=("parallel",),
            vmem_limit_bytes=vmem_limit_bytes,
        ),
        **kwargs,
    )(x2d)


def swish_pallas(
    x: jax.Array,
    *,
    block_bytes: int | None = None,
    vmem_limit_bytes: int | None = None,
    min_pallas_bytes: int = 256 * 1024,
    donate_input: bool = False,
) -> jax.Array:
    """Elementwise swish on an arbitrary-shaped array via a Pallas TPU kernel.

    block_bytes / vmem_limit_bytes: per-generation defaults chosen at runtime
        (6 MiB / 48 MiB on v7x, 4 MiB / 64 MiB on v5e/v6e) when None.
    min_pallas_bytes: inputs smaller than this use plain jnp (dispatch cost of
        a pallas_call exceeds the op itself).  Set 0 to force the kernel path.
    donate_input: alias input buffer to output (use with jit donation).
    """
    orig_shape = x.shape
    n = x.size
    if n == 0:
        return x

    nbytes = n * jnp.dtype(x.dtype).itemsize
    if nbytes < min_pallas_bytes or n < LANES:
        return _swish_plain(x)

    if block_bytes is None or vmem_limit_bytes is None:
        bb, vl = _chip_defaults()
        block_bytes = block_bytes or bb
        vmem_limit_bytes = vmem_limit_bytes or vl

    x_flat = jnp.ravel(x)
    tail = n % LANES

    if tail:
        # Kernel on the 128-aligned bulk, plain jnp on the <128-element tail:
        # avoids the old full-array pad + slice round trip through HBM.
        n_bulk = n - tail
        width = _pick_width(n_bulk)
        out_bulk = _swish_2d(
            x_flat[:n_bulk].reshape(n_bulk // width, width),
            block_bytes=block_bytes,
            vmem_limit_bytes=vmem_limit_bytes,
            donate=donate_input,
        )
        out_tail = _swish_plain(x_flat[n_bulk:])
        out_flat = jnp.concatenate([out_bulk.reshape(-1), out_tail])
        return out_flat.reshape(orig_shape)

    width = _pick_width(n)
    out2d = _swish_2d(
        x_flat.reshape(n // width, width),
        block_bytes=block_bytes,
        vmem_limit_bytes=vmem_limit_bytes,
        donate=donate_input,
    )
    return out2d.reshape(orig_shape)


class SwishPallas:
    """Mirror of sparseml's Swish module: forward(x) = x * sigmoid(x).

    num_channels is stored for API parity but (as in the PyTorch module) has
    no parameters and no effect on the forward computation.
    """

    def __init__(self, num_channels: int = -1):
        self.num_channels = num_channels

    def __call__(self, x: jax.Array) -> jax.Array:
        return swish_pallas(x)


if __name__ == "__main__":
    key = jax.random.PRNGKey(0)
    k0, k1, k2, k3 = jax.random.split(key, 4)

    def ref_swish(a):
        af = a.astype(jnp.float32)
        return (af * jax.nn.sigmoid(af)).astype(a.dtype)

    # 1) Module API at the spec's small NCHW shape (uses the tiny-input
    #    fallback path by default — same semantics).
    x = jax.random.normal(k0, (2, 4, 16, 16), dtype=jnp.float32)
    mod = SwishPallas(num_channels=4)
    out = jax.block_until_ready(mod(x))
    assert out.shape == x.shape and out.dtype == x.dtype
    assert jnp.allclose(out, ref_swish(x), atol=1e-5, rtol=1e-5)

    # 2) Same small input forced through the Pallas kernel path.
    out_k = jax.block_until_ready(swish_pallas(x, min_pallas_bytes=0))
    assert jnp.allclose(out_k, ref_swish(x), atol=1e-5, rtol=1e-5)

    # 3) Medium tensor (512 KiB) through the default kernel path — exercises
    #    the >=4-step grid split and auto double-buffering.
    xm = jax.random.normal(k1, (8, 16, 32, 32), dtype=jnp.float32)
    om = jax.block_until_ready(swish_pallas(xm))
    assert om.shape == xm.shape
    assert jnp.allclose(om, ref_swish(xm), atol=1e-5, rtol=1e-5)

    # 4) bf16 through the kernel (exercises sublane-granularity tiling).
    xb = jax.random.normal(k2, (2, 4, 16, 16)).astype(jnp.bfloat16)
    ob = jax.block_until_ready(swish_pallas(xb, min_pallas_bytes=0))
    assert ob.dtype == jnp.bfloat16
    assert jnp.allclose(ob.astype(jnp.float32),
                        ref_swish(xb).astype(jnp.float32),
                        atol=1e-2, rtol=1e-2)

    # 5) Size not a multiple of 128: kernel on the aligned bulk + jnp tail.
    xo = jax.random.normal(k3, (515, 130), dtype=jnp.float32)
    oo = jax.block_until_ready(swish_pallas(xo, min_pallas_bytes=0))
    assert oo.shape == xo.shape
    assert jnp.allclose(oo, ref_swish(xo), atol=1e-5, rtol=1e-5)

    print("KERNEL_OK")
</pallas_src>

<mosaic_0001>
module attributes {stable_mosaic.version = 11 : i64} {
  func.func @_swish_kernel(%arg0: i32, %arg1: memref<8x256xf32, #tpu.memory_space<vmem>>, %arg2: memref<8x256xf32, #tpu.memory_space<vmem>>) attributes {dimension_semantics = [#tpu.dimension_semantics<parallel>], iteration_bounds = array<i64: 1>, scalar_prefetch = 0 : i64, scratch_operands = 0 : i64, tpu.core_type = #tpu.core_type<tc>, window_params = [{transform_indices = @transform_0, window_bounds = array<i64: 8, 256>}, {transform_indices = @transform_1, window_bounds = array<i64: 8, 256>}]} {
    %c0 = arith.constant 0 : index
    %c0_0 = arith.constant 0 : index
    %0 = vector.load %arg1[%c0, %c0_0] : memref<8x256xf32, #tpu.memory_space<vmem>>, vector<8x256xf32>
    %1 = arith.negf %0 : vector<8x256xf32>
    %2 = math.exp %1 : vector<8x256xf32>
    %cst = arith.constant 1.000000e+00 : f32
    %3 = vector.broadcast %cst : f32 to vector<8x256xf32>
    %4 = arith.addf %3, %2 : vector<8x256xf32>
    %5 = arith.divf %3, %4 : vector<8x256xf32>
    %6 = arith.mulf %0, %5 : vector<8x256xf32>
    %c0_1 = arith.constant 0 : index
    %c0_2 = arith.constant 0 : index
    %7 = vector.load %arg2[%c0_1, %c0_2] : memref<8x256xf32, #tpu.memory_space<vmem>>, vector<8x256xf32>
    tpu.vector_store %arg2[%c0_1, %c0_2], %6 {strides = array<i32>} : memref<8x256xf32, #tpu.memory_space<vmem>>, vector<8x256xf32>,
    return
  }
  func.func @transform_0(%arg0: i32) -> (i32, i32) {
    %c0_i32 = arith.constant 0 : i32
    %c0_i32_0 = arith.constant 0 : i32
    return %arg0, %c0_i32 : i32, i32
  }
  func.func @transform_1(%arg0: i32) -> (i32, i32) {
    %c0_i32 = arith.constant 0 : i32
    %c0_i32_0 = arith.constant 0 : i32
    return %arg0, %c0_i32 : i32, i32
  }
}

</mosaic_0001>

<llo_original>
// kernel: tpu_custom_call.1
$region0: #{tpu_custom_call.1}
  #allocation0 [shape = 'u32[]', space=smem, size = 0x4, offset = 0x4, fixed_abs, tag = 'smem constant byte address 0x4 - core index']
  #allocation1 [shape = 'u32[144,128]{1,0:T(1,128)}', space=vmem, size = 0x12000, scoped, tag = 'internal scratch']
  %s0 = inlined_call_operand.hbm [shape: f32[8,256], index: 0, kind: input, shape index: {}]
  %s1 = inlined_call_operand.hbm [shape: f32[8,256], index: 1, kind: output, shape index: {}]
  %s2 = sld [smem:[#allocation0]]
  $region18: #{tpu_custom_call.1} parent=0
    _
  %s4 = ssub.s32 1, %s2
  %s5 = scalar_select 0, %s4, %s2
  $region1: #{tpu_custom_call.1} parent=0
    #allocation2 [shape = 'u8[8192]{0}', space=vmem, size = 0x2000, scoped, tag = 'input window, operand 0, single buffered']
    #allocation3 [shape = 's32[1]{0}', space=sflag, size = 0x4, scoped, tag = 'scoped memory for tpu_custom_call.1']
    #allocation4 [shape = 's32[1]{0}', space=sflag, size = 0x4, scoped, tag = 'scoped memory for tpu_custom_call.1']
    #allocation5 [shape = 'u8[8192]{0}', space=vmem, size = 0x2000, scoped, tag = 'output window, operand 0, single buffered']
    %6 = vsyncpa [#allocation3], 0
    %7 = vsyncpa [#allocation4], 0
    // Predicated region
    $region2: #{tpu_custom_call.1} parent=1 // pred_check
      _
    $region3: #{tpu_custom_call.1} parent=1 // pred_check_branch
      %9 = sbr.rel (0) target = $region5
    $region4: #{tpu_custom_call.1} parent=1 // pred_region
      %s11 = ssub.s32 256, 256
      %12 = vsyncadd [#allocation3], %s11
      %s14 = sshll.u32 [#allocation2], 4
      %s15 = int_to_ptr.vmem [resolvable:$true] %s14
      %17 = dma.hbm_to_vmem [thread:$0]  %s0, 256, %s15, [#allocation3]
    $region5: #{tpu_custom_call.1} parent=1 // pred_fallthru
      _
    // Predicated region
    $region6: #{tpu_custom_call.1} parent=1 // pred_check
      _
    $region7: #{tpu_custom_call.1} parent=1 // pred_check_branch
      %19 = sbr.rel (0) target = $region9
    $region8: #{tpu_custom_call.1} parent=1 // pred_region
      %20 = dma.done [#allocation3], 256
    $region9: #{tpu_custom_call.1} parent=1 // pred_fallthru
      _
    %v21 = vld [vmem:[#allocation2] sm:$0xff]
    %v22 = vld [vmem:[#allocation2 + $0x8] sm:$0xff]
    %v23 = vxor.u32 %v21, 2147483648
    %v24 = vxor.u32 %v22, 2147483648
    %v25 = vmul.f32 %v23, 1.442695
    %v26 = vpow.pop %v25
    %v27 = vmul.f32 %v24, 1.442695
    %v28 = vpow.pop %v27
    %v29 = vadd.f32 %v26, 1.0
    %v30 = vadd.f32 %v28, 1.0
    %v31 = vrcp.pop %v29
    %v32 = vmul.f32 1.0, %v31
    %v33 = vrcp.pop %v30
    %v34 = vmul.f32 1.0, %v33
    %v35 = vmul.f32 %v21, %v32
    %v36 = vmul.f32 %v22, %v34
    %37 = vst [vmem:[#allocation5] sm:$0xff] %v35
    %38 = vst [vmem:[#allocation5 + $0x8] sm:$0xff] %v36
    // Predicated region
    $region10: #{tpu_custom_call.1} parent=1 // pred_check
      _
    $region11: #{tpu_custom_call.1} parent=1 // pred_check_branch
      %40 = sbr.rel (0) target = $region13
    $region12: #{tpu_custom_call.1} parent=1 // pred_region
      %s42 = ssub.s32 256, 256
      %43 = vsyncadd [#allocation4], %s42
      %s45 = sshll.u32 [#allocation5], 4
      %s46 = int_to_ptr.vmem [resolvable:$true] %s45
      %48 = dma.vmem_to_hbm [thread:$0]  %s46, 256, %s1, [#allocation4]
    $region13: #{tpu_custom_call.1} parent=1 // pred_fallthru
      _
    // Predicated region
    $region14: #{tpu_custom_call.1} parent=1 // pred_check
      _
    $region15: #{tpu_custom_call.1} parent=1 // pred_check_branch
      %50 = sbr.rel (0) target = $region17
    $region16: #{tpu_custom_call.1} parent=1 // pred_region
      %51 = dma.done [#allocation4], 256
    $region17: #{tpu_custom_call.1} parent=1 // pred_fallthru
      _
    %52 = vsyncpa [#allocation3], 1
    %53 = vsyncpa [#allocation4], 1

</llo_original>
